<compile_context>
chip_gen: v7x
topology: tpu7x:2x2x1
jax: 0.10.0
libtpu: 0.0.40
codegen_flags: <defaults>
</compile_context>

<pallas_src>
import jax
import jax.numpy as jnp
from jax.experimental import pallas as pl
from jax.experimental.pallas import tpu as pltpu


def _round_up(v, m):
    return ((v + m - 1) // m) * m


def _a2img_kernel(w_ref, x_ref, o_ref):
    # w_ref : (Co, Ci)    -- 1x1-conv weight matrix, resident across the grid (f32)
    # x_ref : (1, Ci, T)  -- one batch's tile of T pixels, pixels on the lane axis
    # o_ref : (1, Co, T)  -- matching output tile (lane-dense stores)
    w = w_ref[...]                                           # (Co, Ci) f32
    x = x_ref[0].astype(jnp.float32)                         # (Ci, T)  upcast in-kernel
    y = jnp.dot(w, x, preferred_element_type=jnp.float32)    # (Co, T)
    o_ref[0] = jnp.clip(y, 0.0, 1.0).astype(o_ref.dtype)     # fused clamp(0, 1)


def a2img_forward(x_nchw, weight, *, tile_hw=32768):
    """x_nchw: (B, Ci, H, W) any float dtype; weight: (Co, Ci, 1, 1).

    Returns (B, Co, H, W) in the input dtype.
    """
    B, Ci, H, W = x_nchw.shape
    Co = weight.shape[0]
    HW = H * W
    out_dtype = x_nchw.dtype

    # Free reshape on the native layout (no transpose, no dtype cast, no pad).
    x = x_nchw.reshape(B, Ci, HW)
    w = weight.reshape(Co, Ci).astype(jnp.float32)  # tiny; negligible traffic

    # Tile size: a multiple of 128, capped at the 128-rounded pixel count.
    t = min(_round_up(max(tile_hw, 128), 128), _round_up(HW, 128))

    # Megacore (v7x): keep at least 2 "parallel" grid steps so both
    # TensorCores issue DMAs. Only matters when B == 1 and the whole image
    # would fit in a single tile.
    n_tiles = -(-HW // t)
    if B * n_tiles < 2 and HW > 256:
        t = max(128, _round_up(-(-HW // 2), 128))
        n_tiles = -(-HW // t)

    x_item = jnp.dtype(x.dtype).itemsize
    o_item = jnp.dtype(out_dtype).itemsize

    # Double-buffered block footprint (+ resident weight), with headroom.
    buf_bytes = 2 * (Ci * t * x_item + Co * t * o_item) + Co * Ci * 4
    vmem_limit = int(min(64 * 1024 * 1024, max(16 * 1024 * 1024, 2 * buf_bytes)))

    cost = pl.CostEstimate(
        flops=2 * B * Co * Ci * HW,
        transcendentals=0,
        bytes_accessed=B * HW * (Ci * x_item + Co * o_item) + Co * Ci * 4,
    )

    out = pl.pallas_call(
        _a2img_kernel,
        out_shape=jax.ShapeDtypeStruct((B, Co, HW), out_dtype),
        grid_spec=pltpu.PrefetchScalarGridSpec(
            num_scalar_prefetch=0,
            grid=(B, n_tiles),
            in_specs=[
                pl.BlockSpec((Co, Ci), lambda b, j: (0, 0)),       # resident weights
                pl.BlockSpec((1, Ci, t), lambda b, j: (b, 0, j)),  # pixel tile
            ],
            out_specs=pl.BlockSpec((1, Co, t), lambda b, j: (b, 0, j)),
        ),
        compiler_params=pltpu.CompilerParams(
            dimension_semantics=("parallel", "parallel"),
            vmem_limit_bytes=vmem_limit,
        ),
        cost_estimate=cost,
    )(w, x)

    return out.reshape(B, Co, H, W)


def _reference_forward(x_nchw, weight):
    """Pure-JAX replica of the PyTorch forward, for verification."""
    Co, Ci = weight.shape[0], weight.shape[1]
    w = weight.reshape(Co, Ci).astype(jnp.float32)
    y = jnp.einsum("oc,bchw->bohw", w, x_nchw.astype(jnp.float32))
    return jnp.clip(y, 0.0, 1.0).astype(x_nchw.dtype)


if __name__ == "__main__":
    # Small shapes consistent with the module: input_c=16, output_c=4.
    B, C_IN, C_OUT, H, W = 2, 16, 4, 16, 16

    key = jax.random.PRNGKey(0)
    kx, kw = jax.random.split(key)
    x = jax.random.normal(kx, (B, C_IN, H, W), dtype=jnp.float32)
    # Deterministic weights standing in for the Conv2d(1x1, bias=False) kernel.
    weight = 0.2 * jax.random.normal(kw, (C_OUT, C_IN, 1, 1), dtype=jnp.float32)

    out = a2img_forward(x, weight)
    out = jax.block_until_ready(out)

    ref = _reference_forward(x, weight)
    assert out.shape == (B, C_OUT, H, W)
    assert out.dtype == x.dtype
    assert jnp.allclose(out.astype(jnp.float32), ref.astype(jnp.float32),
                        atol=1e-5, rtol=1e-5), "mismatch vs reference"

    # Ragged pixel count (HW not a multiple of the tile / 128) exercises the
    # pad-free boundary-masking path.
    H2, W2 = 10, 15
    x2 = jax.random.normal(kx, (1, C_IN, H2, W2), dtype=jnp.float32)
    out2 = jax.block_until_ready(a2img_forward(x2, weight, tile_hw=128))
    ref2 = _reference_forward(x2, weight)
    assert jnp.allclose(out2, ref2, atol=1e-5, rtol=1e-5), "ragged mismatch"

    print("KERNEL_OK")
</pallas_src>

<mosaic_0001>
module attributes {stable_mosaic.version = 11 : i64} {
  func.func @_a2img_kernel(%arg0: i32, %arg1: i32, %arg2: memref<4x16xf32, #tpu.memory_space<vmem>>, %arg3: memref<1x16x256xf32, #tpu.memory_space<vmem>>, %arg4: memref<1x4x256xf32, #tpu.memory_space<vmem>>) attributes {dimension_semantics = [#tpu.dimension_semantics<parallel>, #tpu.dimension_semantics<parallel>], iteration_bounds = array<i64: 2, 1>, scalar_prefetch = 0 : i64, scratch_operands = 0 : i64, tpu.core_type = #tpu.core_type<tc>, window_params = [{pipeline_mode = #tpu.pipeline_mode<synchronous>, transform_indices = @transform_0, window_bounds = array<i64: 4, 16>}, {transform_indices = @transform_1, window_bounds = array<i64: 1, 16, 256>}, {transform_indices = @transform_2, window_bounds = array<i64: 1, 4, 256>}]} {
    %c0 = arith.constant 0 : index
    %c0_0 = arith.constant 0 : index
    %0 = vector.load %arg2[%c0, %c0_0] : memref<4x16xf32, #tpu.memory_space<vmem>>, vector<4x16xf32>
    %c0_1 = arith.constant 0 : index
    %c0_2 = arith.constant 0 : index
    %c0_3 = arith.constant 0 : index
    %1 = vector.load %arg3[%c0_1, %c0_2, %c0_3] : memref<1x16x256xf32, #tpu.memory_space<vmem>>, vector<1x16x256xf32>
    %2 = vector.shape_cast %1 : vector<1x16x256xf32> to vector<16x256xf32>
    %cst = arith.constant dense<0.000000e+00> : vector<4x256xf32>
    %3 = tpu.matmul %0, %2, %cst {dimension_numbers = #tpu.dot_dimension_numbers<[1], [0], [0], [1], [0, 0, 1, 1], [], []>} : vector<4x16xf32>, vector<16x256xf32>, vector<4x256xf32> -> vector<4x256xf32>
    %cst_4 = arith.constant 0.000000e+00 : f32
    %cst_5 = arith.constant 1.000000e+00 : f32
    %4 = vector.broadcast %cst_4 : f32 to vector<4x256xf32>
    %5 = arith.maximumf %4, %3 : vector<4x256xf32>
    %6 = vector.broadcast %cst_5 : f32 to vector<4x256xf32>
    %7 = arith.minimumf %6, %5 : vector<4x256xf32>
    %c0_6 = arith.constant 0 : index
    %c0_7 = arith.constant 0 : index
    %c0_8 = arith.constant 0 : index
    %8 = vector.load %arg4[%c0_6, %c0_7, %c0_8] : memref<1x4x256xf32, #tpu.memory_space<vmem>>, vector<1x4x256xf32>
    %9 = vector.shape_cast %8 : vector<1x4x256xf32> to vector<4x256xf32>
    %10 = vector.shape_cast %7 : vector<4x256xf32> to vector<1x4x256xf32>
    tpu.vector_store %arg4[%c0_6, %c0_7, %c0_8], %10 {strides = array<i32>} : memref<1x4x256xf32, #tpu.memory_space<vmem>>, vector<1x4x256xf32>,
    return
  }
  func.func @transform_0(%arg0: i32, %arg1: i32) -> (i32, i32) {
    %c0_i32 = arith.constant 0 : i32
    %c0_i32_0 = arith.constant 0 : i32
    %c0_i32_1 = arith.constant 0 : i32
    return %c0_i32, %c0_i32_0 : i32, i32
  }
  func.func @transform_1(%arg0: i32, %arg1: i32) -> (i32, i32, i32) {
    %c0_i32 = arith.constant 0 : i32
    %c0_i32_0 = arith.constant 0 : i32
    return %arg0, %c0_i32, %arg1 : i32, i32, i32
  }
  func.func @transform_2(%arg0: i32, %arg1: i32) -> (i32, i32, i32) {
    %c0_i32 = arith.constant 0 : i32
    %c0_i32_0 = arith.constant 0 : i32
    return %arg0, %c0_i32, %arg1 : i32, i32, i32
  }
}

</mosaic_0001>

<llo_original>
// kernel: tpu_custom_call.1
$region0: #{tpu_custom_call.1}
  #allocation0 [shape = 'u32[]', space=smem, size = 0x4, offset = 0x4, fixed_abs, tag = 'smem constant byte address 0x4 - core index']
  #allocation1 [shape = 'u32[144,128]{1,0:T(1,128)}', space=vmem, size = 0x12000, scoped, tag = 'internal scratch']
  %s0 = inlined_call_operand.hbm [shape: f32[4,16], index: 0, kind: input, shape index: {}]
  %s1 = inlined_call_operand.hbm [shape: f32[2,16,256], index: 1, kind: input, shape index: {}]
  %s2 = inlined_call_operand.hbm [shape: f32[2,4,256], index: 2, kind: output, shape index: {}]
  %s3 = sld [smem:[#allocation0]]
  $region49: #{tpu_custom_call.1} parent=0
    _
  %s5 = ssub.s32 1, %s3
  %s6 = scalar_select 0, %s5, %s3
  $region1: #{tpu_custom_call.1} parent=0
    #allocation2 [shape = 'u8[2048]{0}', space=vmem, size = 0x800, scoped, tag = 'input window, operand 0, single buffered']
    #allocation3 [shape = 's32[2]{0}', space=sflag, size = 0x8, scoped, tag = 'scoped memory for tpu_custom_call.1']
    #allocation4 [shape = 's32[2]{0}', space=sflag, size = 0x8, scoped, tag = 'scoped memory for tpu_custom_call.1']
    #allocation5 [shape = 'u8[32768]{0}', space=vmem, size = 0x8000, scoped, tag = 'input window, operand 1']
    #allocation6 [shape = 's32[2]{0}', space=sflag, size = 0x8, scoped, tag = 'scoped memory for tpu_custom_call.1']
    #allocation7 [shape = 'u8[8192]{0}', space=vmem, size = 0x2000, scoped, tag = 'output window, operand 0']
    %7 = vsyncpa [#allocation3], 0
    %8 = vsyncpa [#allocation6], 0
    %s9 = scalar_lea.sflag [#allocation6], 1
    %10 = vsyncpa %s9, 0
    %11 = vsyncpa [#allocation4], 0
    %s12 = scalar_lea.sflag [#allocation4], 1
    %13 = vsyncpa %s12, 0
    loop: start=0, step=1, limit=4
    $region2: #{tpu_custom_call.1} parent=1 // loop_pre_header
      _
    $region3: #{tpu_custom_call.1} parent=1 // loop_header
      %s15 = sphi 0, %s19
      %p16 = scmp.ge.s32.totalorder %s15, 4
      %s22 = sphi 0, %s34
      %s23 = sphi 0, %s30
      %s24 = sphi 0, %s22
      %s25 = sphi 0, %s23
      %s26 = sphi 0, %s24
      %s27 = sphi 0, %s25
      %s35 = sphi 0, %s35
      %s37 = sphi 0, %s35
      %s38 = sphi 0, %s37
      %s52 = sphi 0, %s38
      %s60 = sphi 0, %s62
      %s63 = sphi 0, %s60
      %s64 = sphi 0, %s63
      %s80 = sphi 0, %s64
      %s88 = sphi 0, %s90
      %s91 = sphi 0, %s88
      %s92 = sphi 0, %s91
      %s108 = sphi 0, %s92
    $region4: #{tpu_custom_call.1} parent=1 // loop_header_branch
      %18 = sbr.rel (%p16) target = $region8
    $region5: #{tpu_custom_call.1} parent=1 // loop_body
      %s20 = ssub.s32 %s15, 1
      %s21 = ssub.s32 %s15, 2
      %s28 = sadd.s32 1, %s23
      %p29 = scmp.ge.s32.totalorder %s28, 1
      %s30 = scalar_select %p29, 0, %s28
      %s31 = sadd.s32 1, %s22
      %s32 = scalar_select %p29, %s31, %s22
      %p33 = scmp.ge.s32.totalorder %s32, 2
      %s34 = scalar_select %p33, 0, %s32
      %s36 = sadd.s32 %s35, 1
      %p39 = scmp.eq.s32.totalorder %s15, 1
      %p40 = scmp.ne.s32.totalorder %s35, %s37
      %p41 = scmp.eq.s32.totalorder %s15, 0
      %p42 = por %p40, %p41
      %p43 = scmp.ne.s32.totalorder %s35, %s37
      %p44 = scmp.eq.s32.totalorder %s20, 1
      %p45 = por %p43, %p44
      %p46 = scmp.ne.s32.totalorder %s37, %s38
      %p47 = scmp.eq.s32.totalorder %s20, 0
      %p48 = por %p46, %p47
      %p49 = scmp.ne.s32.totalorder %s37, %s38
      %p50 = scmp.eq.s32.totalorder %s21, 1
      %p51 = por %p49, %p50
      %p53 = scmp.ne.s32.totalorder %s38, %s52
      %p54 = scmp.eq.s32.totalorder %s21, 0
      %p55 = por %p53, %p54
      %s56 = ssub.s32 %s22, %s34
      %s57 = ssub.s32 %s23, %s30
      %s58 = sor.u32 %s56, %s57
      %p59 = scmp.eq.s32.totalorder %s58, 0
      %s61 = sadd.s32 %s60, 1
      %s62 = scalar_select %p59, %s60, %s61
      %p65 = pneg %p59
      %p66 = scmp.eq.s32.totalorder %s15, 1
      %p67 = por %p65, %p66
      %p68 = scmp.ne.s32.totalorder %s60, %s63
      %p69 = scmp.eq.s32.totalorder %s15, 0
      %p70 = por %p68, %p69
      %p71 = scmp.ne.s32.totalorder %s60, %s63
      %p72 = scmp.eq.s32.totalorder %s20, 1
      %p73 = por %p71, %p72
      %p74 = scmp.ne.s32.totalorder %s63, %s64
      %p75 = scmp.eq.s32.totalorder %s20, 0
      %p76 = por %p74, %p75
      %p77 = scmp.ne.s32.totalorder %s63, %s64
      %p78 = scmp.eq.s32.totalorder %s21, 1
      %p79 = por %p77, %p78
      %p81 = scmp.ne.s32.totalorder %s64, %s80
      %p82 = scmp.eq.s32.totalorder %s21, 0
      %p83 = por %p81, %p82
      %s84 = ssub.s32 %s22, %s34
      %s85 = ssub.s32 %s23, %s30
      %s86 = sor.u32 %s84, %s85
      %p87 = scmp.eq.s32.totalorder %s86, 0
      %s89 = sadd.s32 %s88, 1
      %s90 = scalar_select %p87, %s88, %s89
      %p93 = pneg %p87
      %p94 = scmp.eq.s32.totalorder %s15, 1
      %p95 = por %p93, %p94
      %p96 = scmp.ne.s32.totalorder %s88, %s91
      %p97 = scmp.eq.s32.totalorder %s15, 0
      %p98 = por %p96, %p97
      %p99 = scmp.ne.s32.totalorder %s88, %s91
      %p100 = scmp.eq.s32.totalorder %s20, 1
      %p101 = por %p99, %p100
      %p102 = scmp.ne.s32.totalorder %s91, %s92
      %p103 = scmp.eq.s32.totalorder %s20, 0
      %p104 = por %p102, %p103
      %p105 = scmp.ne.s32.totalorder %s91, %s92
      %p106 = scmp.eq.s32.totalorder %s21, 1
      %p107 = por %p105, %p106
      %p109 = scmp.ne.s32.totalorder %s92, %s108
      %p110 = scmp.eq.s32.totalorder %s21, 0
      %p111 = por %p109, %p110
      %p112 = scmp.le.s32.totalorder 1, %s15
      %p113 = scmp.lt.s32.totalorder %s15, 3
      %p114 = pnand %p112, %p113
      %p115 = pneg %p114
      // Predicated region
      $region9: #{tpu_custom_call.1} parent=5 // pred_check
        _
      $region10: #{tpu_custom_call.1} parent=5 // pred_check_branch
        %117 = sbr.rel (%p114) target = $region12
      $region11: #{tpu_custom_call.1} parent=5 // pred_region
        %s118 = ssub.s32 %s15, 1
        // Predicated region
        $region13: #{tpu_custom_call.1} parent=11 // pred_check
          %p119 = pneg %p48
        $region14: #{tpu_custom_call.1} parent=11 // pred_check_branch
          %121 = sbr.rel (%p119) target = $region16
        $region15: #{tpu_custom_call.1} parent=11 // pred_region
          %s123 = ssub.s32 64, 64
          %124 = vsyncadd [#allocation3], %s123
          %s126 = sshll.u32 [#allocation2], 4
          %s127 = int_to_ptr.vmem [resolvable:$true] %s126
          %129 = dma.hbm_to_vmem [thread:$0]  %s0, 64, %s127, [#allocation3]
        $region16: #{tpu_custom_call.1} parent=11 // pred_fallthru
          _
      $region12: #{tpu_custom_call.1} parent=5 // pred_fallthru
        _
      %p130 = scmp.lt.s32.totalorder %s15, 2
      // Predicated region
      $region17: #{tpu_custom_call.1} parent=5 // pred_check
        %p131 = pneg %p130
      $region18: #{tpu_custom_call.1} parent=5 // pred_check_branch
        %133 = sbr.rel (%p131) target = $region20
      $region19: #{tpu_custom_call.1} parent=5 // pred_region
        // Predicated region
        $region21: #{tpu_custom_call.1} parent=19 // pred_check
          %p134 = pneg %p70
        $region22: #{tpu_custom_call.1} parent=19 // pred_check_branch
          %136 = sbr.rel (%p134) target = $region24
        $region23: #{tpu_custom_call.1} parent=19 // pred_region
          %s137 = sand.u32 %s60, 1
          %s138 = scalar_lea.sflag [#allocation6], %s137
          %s139 = sand.u32 %s60, 1
          %s140 = smul.addr %s139, 32
          %s141 = scalar_lea.vmem [#allocation5], %s140
          %s142 = smul.u32 2, %s23
          %s144 = ssub.s32 512, 512
          %145 = vsyncadd %s138, %s144
          %s146 = smul.addr %s22, 4
          %s147 = sadd.s32 %s142, %s146
          %s148 = smul.addr %s147, 128
          %s149 = scalar_lea.hbm %s1, %s148
          %s150 = sshll.u32 %s141, 4
          %s151 = int_to_ptr.vmem [resolvable:$true] %s150
          %156 = dma.hbm_to_vmem [thread:$0]  %s149, 512, %s151, %s138, 256, 256, 16
        $region24: #{tpu_custom_call.1} parent=19 // pred_fallthru
          _
      $region20: #{tpu_custom_call.1} parent=5 // pred_fallthru
        _
      %p157 = scmp.le.s32.totalorder 1, %s15
      %p158 = scmp.lt.s32.totalorder %s15, 3
      %p159 = pnand %p157, %p158
      %p160 = pneg %p159
      // Predicated region
      $region25: #{tpu_custom_call.1} parent=5 // pred_check
        _
      $region26: #{tpu_custom_call.1} parent=5 // pred_check_branch
        %162 = sbr.rel (%p159) target = $region28
      $region27: #{tpu_custom_call.1} parent=5 // pred_region
        %s163 = ssub.s32 %s15, 1
        // Predicated region
        $region29: #{tpu_custom_call.1} parent=27 // pred_check
          %p164 = pneg %p48
        $region30: #{tpu_custom_call.1} parent=27 // pred_check_branch
          %166 = sbr.rel (%p164) target = $region32
        $region31: #{tpu_custom_call.1} parent=27 // pred_region
          %167 = dma.done [#allocation3], 64
        $region32: #{tpu_custom_call.1} parent=27 // pred_fallthru
          _
        %s168 = sand.u32 %s63, 1
        %s169 = scalar_lea.sflag [#allocation6], %s168
        %s170 = sand.u32 %s63, 1
        %s171 = smul.addr %s170, 32
        %s172 = scalar_lea.vmem [#allocation5], %s171
        // Predicated region
        $region33: #{tpu_custom_call.1} parent=27 // pred_check
          %p173 = pneg %p76
        $region34: #{tpu_custom_call.1} parent=27 // pred_check_branch
          %175 = sbr.rel (%p173) target = $region36
        $region35: #{tpu_custom_call.1} parent=27 // pred_region
          %176 = dma.done %s169, 512
        $region36: #{tpu_custom_call.1} parent=27 // pred_fallthru
          _
        %p177 = pneg %p48
        %p178 = pneg %p45
        %s179 = sand.u32 %s63, 1
        %s180 = scalar_lea.sflag [#allocation6], %s179
        %s181 = sand.u32 %s63, 1
        %s182 = smul.addr %s181, 32
        %s183 = scalar_lea.vmem [#allocation5], %s182
        %p184 = pneg %p76
        %p185 = pneg %p73
        %p186 = pneg %p104
        %p187 = pneg %p101
        %s188 = sand.u32 %s91, 1
        %s189 = scalar_lea.sflag [#allocation4], %s188
        %s190 = sand.u32 %s91, 1
        %s191 = smul.addr %s190, 8
        %s192 = scalar_lea.vmem [#allocation7], %s191
        %s193 = smul.u32 2, %s25
        %s194 = smul.u32 2, %s25
        %v195 = vld [vmem:[#allocation2] sm:$0xf]
        %v196 = vld [vmem:[%s172] sm:$0xff]
        %v197 = vld [vmem:[%s172 + $0x8] sm:$0xff]
        %v198 = vld [vmem:[%s172 + $0x10] sm:$0xff]
        %v199 = vld [vmem:[%s172 + $0x18] sm:$0xff]
        %vm200 = vcmask 130048
        %v202 = vsel %vm200, %v195, 0
        %204 = vmatprep.subr.mxu0 %v197
        %205 = vmatpush1.msra.mxu0 %v196
        %206 = vmatprep.subr.mxu0 %v199
        %207 = vmatpush1.msra.mxu0 %v198
        %208 = vmatprep.subr.mxu0 0.0
        %209 = vmatpush1.msra.mxu0 0.0
        %210 = vmatprep.subr.mxu0 0.0
        %211 = vmatpush1.msra.mxu0 0.0
        %212 = vmatprep.subr.mxu0 0.0
        %213 = vmatpush1.msra.mxu0 0.0
        %214 = vmatprep.subr.mxu0 0.0
        %215 = vmatpush1.msra.mxu0 0.0
        %216 = vmatprep.subr.mxu0 0.0
        %217 = vmatpush1.msra.mxu0 0.0
        %218 = vmatprep.subr.mxu0 0.0
        %219 = vmatpush1.msra.mxu0 0.0
        %220 = vmatprep.subr.mxu0 0.0
        %221 = vmatpush1.msra.mxu0 0.0
        %222 = vmatprep.subr.mxu0 0.0
        %223 = vmatpush1.msra.mxu0 0.0
        %224 = vmatprep.subr.mxu0 0.0
        %225 = vmatpush1.msra.mxu0 0.0
        %226 = vmatprep.subr.mxu0 0.0
        %227 = vmatpush1.msra.mxu0 0.0
        %228 = vmatprep.subr.mxu0 0.0
        %229 = vmatpush1.msra.mxu0 0.0
        %230 = vmatprep.subr.mxu0 0.0
        %231 = vmatpush1.msra.mxu0 0.0
        %232 = vmatprep.subr.mxu0 0.0
        %233 = vmatpush1.msra.mxu0 0.0
        %234 = vmatprep.subr.mxu0 0.0
        %235 = vmatpush1.msra.mxu0 0.0
        %236 = vmatprep.subr.mxu0 0.0
        %237 = vmatpush1.msra.mxu0 0.0
        %238 = vmatprep.subr.mxu0 0.0
        %239 = vmatpush1.msra.mxu0 0.0
        %240 = vmatprep.subr.mxu0 0.0
        %241 = vmatpush1.msra.mxu0 0.0
        %242 = vmatprep.subr.mxu0 0.0
        %243 = vmatpush1.msra.mxu0 0.0
        %244 = vmatprep.subr.mxu0 0.0
        %245 = vmatpush1.msra.mxu0 0.0
        %246 = vmatprep.subr.mxu0 0.0
        %247 = vmatpush1.msra.mxu0 0.0
        %248 = vmatprep.subr.mxu0 0.0
        %249 = vmatpush1.msra.mxu0 0.0
        %250 = vmatprep.subr.mxu0 0.0
        %251 = vmatpush1.msra.mxu0 0.0
        %252 = vmatprep.subr.mxu0 0.0
        %253 = vmatpush1.msra.mxu0 0.0
        %254 = vmatprep.subr.mxu0 0.0
        %255 = vmatpush1.msra.mxu0 0.0
        %256 = vmatprep.subr.mxu0 0.0
        %257 = vmatpush1.msra.mxu0 0.0
        %258 = vmatprep.subr.mxu0 0.0
        %259 = vmatpush1.msra.mxu0 0.0
        %260 = vmatprep.subr.mxu0 0.0
        %261 = vmatpush1.msra.mxu0 0.0
        %262 = vmatprep.subr.mxu0 0.0
        %263 = vmatpush1.msra.mxu0 0.0
        %264 = vmatprep.subr.mxu0 0.0
        %265 = vmatpush1.msra.mxu0 0.0
        %266 = vmatprep.subr.mxu0 0.0
        %267 = vmatpush1.msra.mxu0 0.0
        %268 = vmatprep.mubr.f32.mxu0 0.0
        %269 = vmatmul.mubr.f32.gmra.mrb[0].mxu0 %v202
        %v270 = vpop.f32.mrb[0].mxu0
        %v271 = vadd.f32 0.0, %v270
        %v272 = vpop.f32.mrb[0].mxu0
        %v273 = vadd.f32 0.0, %v272
        %274 = vdwg.mxu0
        %v275 = vmax.f32 %v271, 0.0
        %v276 = vmax.f32 %v273, 0.0
        %v277 = vmin.f32 %v275, 1.0
        %v278 = vmin.f32 %v276, 1.0
        %v281 = vcombine.low %v277, %v278
        %283 = vst [vmem:[%s192] sm:$0xff] %v281
        %s284 = sand.u32 %s91, 1
        %s285 = scalar_lea.sflag [#allocation4], %s284
        %s286 = sand.u32 %s91, 1
        %s287 = smul.addr %s286, 8
        %s288 = scalar_lea.vmem [#allocation7], %s287
        // Predicated region
        $region37: #{tpu_custom_call.1} parent=27 // pred_check
          %p289 = pneg %p101
        $region38: #{tpu_custom_call.1} parent=27 // pred_check_branch
          %291 = sbr.rel (%p289) target = $region40
        $region39: #{tpu_custom_call.1} parent=27 // pred_region
          %s292 = smul.u32 2, %s25
          %s294 = ssub.s32 128, 128
          %295 = vsyncadd %s285, %s294
          %s296 = smul.addr %s24, 2
          %s297 = sadd.s32 %s292, %s296
          %s298 = smul.addr %s297, 64
          %s299 = scalar_lea.hbm %s2, %s298
          %s301 = sshll.u32 %s288, 4
          %s302 = int_to_ptr.vmem [resolvable:$true] %s301
          %304 = dma.vmem_to_hbm [thread:$0]  %s302, 128, %s299, %s285
        $region40: #{tpu_custom_call.1} parent=27 // pred_fallthru
          _
      $region28: #{tpu_custom_call.1} parent=5 // pred_fallthru
        _
      %p305 = scmp.le.s32.totalorder 2, %s15
      // Predicated region
      $region41: #{tpu_custom_call.1} parent=5 // pred_check
        %p306 = pneg %p305
      $region42: #{tpu_custom_call.1} parent=5 // pred_check_branch
        %308 = sbr.rel (%p306) target = $region44
      $region43: #{tpu_custom_call.1} parent=5 // pred_region
        %s309 = ssub.s32 %s15, 2
        // Predicated region
        $region45: #{tpu_custom_call.1} parent=43 // pred_check
          %p310 = pneg %p107
        $region46: #{tpu_custom_call.1} parent=43 // pred_check_branch
          %312 = sbr.rel (%p310) target = $region48
        $region47: #{tpu_custom_call.1} parent=43 // pred_region
          %s313 = sand.u32 %s92, 1
          %s314 = scalar_lea.sflag [#allocation4], %s313
          %s315 = sand.u32 %s92, 1
          %s316 = smul.addr %s315, 8
          %s317 = scalar_lea.vmem [#allocation7], %s316
          %318 = dma.done %s314, 128
        $region48: #{tpu_custom_call.1} parent=43 // pred_fallthru
          _
      $region44: #{tpu_custom_call.1} parent=5 // pred_fallthru
        _
    $region6: #{tpu_custom_call.1} parent=1 // loop_footer
      %s19 = sadd.s32 1, %s15
    $region7: #{tpu_custom_call.1} parent=1 // loop_footer_branch
      %14 = sbr.rel target = $region3
    $region8: #{tpu_custom_call.1} parent=1 // loop_exit
      _
    %319 = vsyncpa [#allocation3], 1
    %s320 = scalar_lea.sflag [#allocation3], 1
    %321 = vsyncpa %s320, 1
    %322 = vsyncpa [#allocation6], 1
    %s323 = scalar_lea.sflag [#allocation6], 1
    %324 = vsyncpa %s323, 1
    %325 = vsyncpa [#allocation4], 1
    %s326 = scalar_lea.sflag [#allocation4], 1
    %327 = vsyncpa %s326, 1

</llo_original>
